<compile_context>
chip_gen: v6e
topology: v6e:2x2x1
jax: 0.10.0
libtpu: 0.0.40
codegen_flags: <defaults>
</compile_context>

<pallas_src>
import jax
import jax.numpy as jnp
from jax.experimental import pallas as pl
from jax.experimental.pallas import tpu as pltpu


def _round_up(x, m):
    return ((x + m - 1) // m) * m


def _cdiv(a, b):
    return -(-a // b)


# ---------------------------------------------------------------------------
# Kernels
# ---------------------------------------------------------------------------

def _stats_kernel(x_ref, colsum_ref, gram_ref, *xcast_refs):
    """Per row-tile Gram statistics of x (y = x @ W^T is never materialized):
         colsum = 1^T x   (1, Cin)       gram = x^T x   (Cin, Cin)
    Optionally also emits x cast to the pass-2 compute dtype (fused cast)."""
    x = x_ref[...]
    colsum_ref[...] = jnp.sum(x, axis=0, keepdims=True)[None]          # (1, 1, Cin)
    gram_ref[...] = jax.lax.dot_general(
        x, x, dimension_numbers=(((0,), (0,)), ((), ())),
        preferred_element_type=jnp.float32)[None]                       # (1, Cin, Cin)
    for xc_ref in xcast_refs:
        xc_ref[...] = x.astype(xc_ref.dtype)


def _folded_linear_relu_kernel(x_ref, wf_ref, shift_ref, o_ref):
    """Per row-tile: relu(x @ W_folded + shift)  (BatchNorm folded into weights)."""
    y = jnp.dot(x_ref[...], wf_ref[...], preferred_element_type=jnp.float32)
    o_ref[...] = jnp.maximum(y + shift_ref[...], 0.0).astype(o_ref.dtype)


# ---------------------------------------------------------------------------
# VMEM budgeting & tiling
# ---------------------------------------------------------------------------

def _vmem_budget_bytes():
    """Usable scoped-VMEM budget: physical VMEM minus ~16 MiB compiler/internal
    scratch headroom, capped at 100 MiB (so 128 MiB parts use big tiles while
    v7x's 64 MiB parts keep real headroom)."""
    cap = 64 << 20                       # conservative default (v7x physical / TC)
    try:
        cap = int(getattr(pltpu.get_tpu_info(), "vmem_capacity_bytes", cap))
    except Exception:
        pass
    budget = max(cap - (16 << 20), cap // 2)
    return int(min(budget, 100 << 20))


def _step_vmem_bytes(tm, cin, cout, x_isz, c_isz, o_isz, emit_cast):
    """Lane/sublane-padded VMEM footprint of one grid step (max over both
    passes), assuming double-buffered BlockSpec pipelining."""
    cin_l = _round_up(cin, 128)
    cout_l = _round_up(cout, 128)
    cin_s = _round_up(cin, 8)
    # pass 1: f32 x tile (+ optional compute-dtype sidecar) + tiny stat partials
    p1 = 2 * tm * cin_l * x_isz
    p1 += 2 * (8 * cin_l + cin_s * cin_l) * 4
    if emit_cast:
        p1 += 2 * tm * cin_l * c_isz
    # pass 2: x tile (compute dtype) + output tile + folded weights + shift
    p2 = 2 * tm * cin_l * c_isz
    p2 += 2 * tm * cout_l * o_isz
    p2 += 2 * cin_s * cout_l * c_isz
    p2 += 2 * 8 * cout_l * 4
    return max(p1, p2)


def _choose_tiling(n, tm_max, fits):
    """Pick (tm_eff, num_blocks, n_pad): largest row tile fitting the VMEM
    budget, then rebalanced into even-sized blocks (minimal zero-padding) with
    >= 2 blocks whenever possible so the 'parallel' grid axis can be sharded
    across v7x's two TensorCores."""
    tm_cap = max(8, min(_round_up(tm_max, 8), _round_up(n, 8)))
    while tm_cap > 8 and not fits(tm_cap):
        tm_cap = max(8, _round_up(tm_cap // 2, 8))
    nb = _cdiv(n, tm_cap)
    if nb == 1 and n > 8:
        nb = 2                          # keep both v7x TensorCores busy
    elif nb > 2 and nb % 2:
        nb += 1                         # even block count -> balanced megacore split
    tm_eff = max(8, min(tm_cap, _round_up(_cdiv(n, nb), 8)))
    nb = _cdiv(n, tm_eff)
    return tm_eff, nb, nb * tm_eff


# ---------------------------------------------------------------------------
# Wrapper
# ---------------------------------------------------------------------------

def transition_down_stride1(p, x, o, weight, gamma, beta, *, eps=1e-5, tm=8192,
                            compute_dtype=jnp.bfloat16, out_dtype=None):
    """Pallas implementation of TransitionDown.forward for stride == 1.

    p: (N, 3) float32     point coordinates (passed through)
    x: (N, Cin) float32   point features
    o: (B,) int32         batch offsets (passed through)
    weight: (Cout, Cin)   nn.Linear weight (no bias)
    gamma, beta: (Cout,) or (1, Cout)  BatchNorm1d affine params
    compute_dtype: pass-2 matmul operand dtype (bf16 halves streamed bytes; the
        batch statistics are always computed from the f32 input).
    out_dtype: output dtype (defaults to x.dtype).
    """
    n, cin = x.shape
    cout = weight.shape[0]
    weight = jnp.asarray(weight, jnp.float32)               # (Cout, Cin)
    gamma = jnp.asarray(gamma, jnp.float32).reshape(1, cout)
    beta = jnp.asarray(beta, jnp.float32).reshape(1, cout)
    out_dtype = jnp.dtype(x.dtype if out_dtype is None else out_dtype)
    compute_dtype = jnp.dtype(compute_dtype)
    emit_cast = compute_dtype != x.dtype

    budget = _vmem_budget_bytes()
    x_isz = jnp.dtype(x.dtype).itemsize
    c_isz = compute_dtype.itemsize
    o_isz = out_dtype.itemsize

    def fits(t):
        return _step_vmem_bytes(t, cin, cout, x_isz, c_isz, o_isz,
                                emit_cast) + (2 << 20) <= budget

    tm_eff, nb, n_pad = _choose_tiling(n, tm, fits)
    x_p = jnp.pad(x, ((0, n_pad - n), (0, 0))) if n_pad != n else x
    grid = (nb,)
    cparams = pltpu.CompilerParams(
        dimension_semantics=("parallel",),
        vmem_limit_bytes=budget,
    )

    # ---- Pass 1: per-tile Gram statistics of x (no y anywhere), optional
    #      fused cast of x to the pass-2 compute dtype. -----------------------
    p1_shapes = [jax.ShapeDtypeStruct((nb, 1, cin), jnp.float32),
                 jax.ShapeDtypeStruct((nb, cin, cin), jnp.float32)]
    p1_specs = [pl.BlockSpec((1, 1, cin), lambda i: (i, 0, 0)),
                pl.BlockSpec((1, cin, cin), lambda i: (i, 0, 0))]
    if emit_cast:
        p1_shapes.append(jax.ShapeDtypeStruct((n_pad, cin), compute_dtype))
        p1_specs.append(pl.BlockSpec((tm_eff, cin), lambda i: (i, 0)))

    p1_out = pl.pallas_call(
        _stats_kernel,
        out_shape=tuple(p1_shapes),
        grid_spec=pltpu.PrefetchScalarGridSpec(
            num_scalar_prefetch=0,
            grid=grid,
            in_specs=[pl.BlockSpec((tm_eff, cin), lambda i: (i, 0))],
            out_specs=tuple(p1_specs),
        ),
        compiler_params=cparams,
    )(x_p)
    if emit_cast:
        colsum_p, gram_p, x_c = p1_out
    else:
        colsum_p, gram_p = p1_out
        x_c = x_p

    # ---- Glue: exact BN stats from the Gram matrix, fold BN into weights. ----
    n_f = jnp.float32(n)                                 # true N (padded rows are 0)
    colsum = jnp.sum(colsum_p, axis=0)                   # (1, Cin)
    gram = jnp.sum(gram_p, axis=0)                       # (Cin, Cin)
    wt = weight.T                                        # (Cin, Cout)
    mean = (colsum @ wt) / n_f                           # (1, Cout)
    ey2 = jnp.sum((weight @ gram) * weight, axis=1)[None, :] / n_f   # (1, Cout)
    var = jnp.maximum(ey2 - mean * mean, 0.0)            # biased variance (training BN)
    scale = jax.lax.rsqrt(var + eps) * gamma             # (1, Cout)
    shift = beta - mean * scale                          # (1, Cout), kept f32
    wf = (wt * scale).astype(compute_dtype)              # (Cin, Cout) folded weights

    # ---- Pass 2: relu(x @ W_folded + shift), written straight to the output. --
    out_p = pl.pallas_call(
        _folded_linear_relu_kernel,
        out_shape=jax.ShapeDtypeStruct((n_pad, cout), out_dtype),
        grid_spec=pltpu.PrefetchScalarGridSpec(
            num_scalar_prefetch=0,
            grid=grid,
            in_specs=[pl.BlockSpec((tm_eff, cin), lambda i: (i, 0)),
                      pl.BlockSpec((cin, cout), lambda i: (0, 0)),
                      pl.BlockSpec((1, cout), lambda i: (0, 0))],
            out_specs=pl.BlockSpec((tm_eff, cout), lambda i: (i, 0)),
        ),
        compiler_params=cparams,
    )(x_c, wf, shift)

    out = out_p[:n] if n_pad != n else out_p
    return [p, out, o]


# ---------------------------------------------------------------------------
# Reference & tests
# ---------------------------------------------------------------------------

def _reference(x, weight, gamma, beta, eps=1e-5):
    y = x @ weight.T
    mean = jnp.mean(y, axis=0, keepdims=True)
    var = jnp.mean((y - mean) ** 2, axis=0, keepdims=True)   # biased
    return jnp.maximum((y - mean) / jnp.sqrt(var + eps) * gamma + beta, 0.0)


def _run_case(key, n, cin, cout, compute_dtype, tol):
    kp, kx, kw, kg, kb = jax.random.split(key, 5)
    p = jax.random.normal(kp, (n, 3), dtype=jnp.float32)
    x = jax.random.normal(kx, (n, cin), dtype=jnp.float32)
    o = jnp.array([n], dtype=jnp.int32)
    weight = jax.random.normal(kw, (cout, cin), dtype=jnp.float32) * 0.1
    gamma = 1.0 + 0.1 * jax.random.normal(kg, (1, cout), dtype=jnp.float32)
    beta = 0.05 * jax.random.normal(kb, (1, cout), dtype=jnp.float32)

    p_out, x_out, o_out = transition_down_stride1(
        p, x, o, weight, gamma, beta, compute_dtype=compute_dtype)
    x_out = jax.block_until_ready(x_out)

    ref = _reference(x, weight, gamma, beta)
    assert x_out.shape == (n, cout) and x_out.dtype == jnp.float32
    err = float(jnp.max(jnp.abs(x_out - ref)))
    assert jnp.allclose(x_out, ref, rtol=tol, atol=tol), (
        f"mismatch vs reference (max abs err={err:.3e}, tol={tol})")
    assert p_out.shape == p.shape and o_out.shape == o.shape


if __name__ == "__main__":
    key = jax.random.PRNGKey(0)
    k1, k2, k3 = jax.random.split(key, 3)

    # Small shape matching the module head (planes[0]=32): N=64, Cin=16, Cout=32.
    _run_case(k1, n=64, cin=16, cout=32, compute_dtype=jnp.bfloat16, tol=3e-2)
    # f32 compute path, non-tile-multiple N (block balancing, tight tolerance).
    _run_case(k2, n=1152, cin=32, cout=64, compute_dtype=jnp.float32, tol=1e-3)
    # Larger N: two balanced row blocks, bf16 pass-2 operands via fused cast.
    _run_case(k3, n=4104, cin=32, cout=64, compute_dtype=jnp.bfloat16, tol=3e-2)

    print("KERNEL_OK")
</pallas_src>

<mosaic_0001>
module attributes {stable_mosaic.version = 11 : i64} {
  func.func @_stats_kernel(%arg0: i32, %arg1: memref<32x16xf32, #tpu.memory_space<vmem>>, %arg2: memref<1x1x16xf32, #tpu.memory_space<vmem>>, %arg3: memref<1x16x16xf32, #tpu.memory_space<vmem>>, %arg4: memref<32x16xbf16, #tpu.memory_space<vmem>>) attributes {dimension_semantics = [#tpu.dimension_semantics<parallel>], iteration_bounds = array<i64: 2>, scalar_prefetch = 0 : i64, scratch_operands = 0 : i64, tpu.core_type = #tpu.core_type<tc>, window_params = [{transform_indices = @transform_0, window_bounds = array<i64: 32, 16>}, {transform_indices = @transform_1, window_bounds = array<i64: 1, 1, 16>}, {transform_indices = @transform_2, window_bounds = array<i64: 1, 16, 16>}, {transform_indices = @transform_3, window_bounds = array<i64: 32, 16>}]} {
    %c0 = arith.constant 0 : index
    %c0_0 = arith.constant 0 : index
    %0 = vector.load %arg1[%c0, %c0_0] : memref<32x16xf32, #tpu.memory_space<vmem>>, vector<32x16xf32>
    %cst = arith.constant dense<0.000000e+00> : vector<16xf32>
    %1 = vector.multi_reduction <add>, %0, %cst [0] : vector<32x16xf32> to vector<16xf32>
    %2 = vector.shape_cast %1 : vector<16xf32> to vector<1x16xf32>
    %3 = vector.shape_cast %2 : vector<1x16xf32> to vector<1x1x16xf32>
    %c0_1 = arith.constant 0 : index
    %c0_2 = arith.constant 0 : index
    %c0_3 = arith.constant 0 : index
    %4 = vector.load %arg2[%c0_1, %c0_2, %c0_3] : memref<1x1x16xf32, #tpu.memory_space<vmem>>, vector<1x1x16xf32>
    tpu.vector_store %arg2[%c0_1, %c0_2, %c0_3], %3 {strides = array<i32>} : memref<1x1x16xf32, #tpu.memory_space<vmem>>, vector<1x1x16xf32>,
    %cst_4 = arith.constant dense<0.000000e+00> : vector<16x16xf32>
    %5 = tpu.matmul %0, %0, %cst_4 {dimension_numbers = #tpu.dot_dimension_numbers<[0], [0], [1], [1], [0, 1, 1, 1], [], []>} : vector<32x16xf32>, vector<32x16xf32>, vector<16x16xf32> -> vector<16x16xf32>
    %6 = vector.shape_cast %5 : vector<16x16xf32> to vector<1x16x16xf32>
    %c0_5 = arith.constant 0 : index
    %c0_6 = arith.constant 0 : index
    %c0_7 = arith.constant 0 : index
    %7 = vector.load %arg3[%c0_5, %c0_6, %c0_7] : memref<1x16x16xf32, #tpu.memory_space<vmem>>, vector<1x16x16xf32>
    tpu.vector_store %arg3[%c0_5, %c0_6, %c0_7], %6 {strides = array<i32>} : memref<1x16x16xf32, #tpu.memory_space<vmem>>, vector<1x16x16xf32>,
    %8 = arith.truncf %0 : vector<32x16xf32> to vector<32x16xbf16>
    %c0_8 = arith.constant 0 : index
    %c0_9 = arith.constant 0 : index
    %9 = vector.load %arg4[%c0_8, %c0_9] : memref<32x16xbf16, #tpu.memory_space<vmem>>, vector<32x16xbf16>
    tpu.vector_store %arg4[%c0_8, %c0_9], %8 {strides = array<i32>} : memref<32x16xbf16, #tpu.memory_space<vmem>>, vector<32x16xbf16>,
    return
  }
  func.func @transform_0(%arg0: i32) -> (i32, i32) {
    %c0_i32 = arith.constant 0 : i32
    %c0_i32_0 = arith.constant 0 : i32
    return %arg0, %c0_i32 : i32, i32
  }
  func.func @transform_1(%arg0: i32) -> (i32, i32, i32) {
    %c0_i32 = arith.constant 0 : i32
    %c0_i32_0 = arith.constant 0 : i32
    %c0_i32_1 = arith.constant 0 : i32
    return %arg0, %c0_i32, %c0_i32_0 : i32, i32, i32
  }
  func.func @transform_2(%arg0: i32) -> (i32, i32, i32) {
    %c0_i32 = arith.constant 0 : i32
    %c0_i32_0 = arith.constant 0 : i32
    %c0_i32_1 = arith.constant 0 : i32
    return %arg0, %c0_i32, %c0_i32_0 : i32, i32, i32
  }
  func.func @transform_3(%arg0: i32) -> (i32, i32) {
    %c0_i32 = arith.constant 0 : i32
    %c0_i32_0 = arith.constant 0 : i32
    return %arg0, %c0_i32 : i32, i32
  }
}

</mosaic_0001>

<llo_original>
// kernel: tpu_custom_call.1
$region0: #{tpu_custom_call.1}
  #allocation0 [shape = 'u32[]', space=smem, size = 0x4, offset = 0x4, fixed_abs, tag = 'smem constant byte address 0x4 - core index']
  #allocation1 [shape = 'u32[144,128]{1,0:T(1,128)}', space=vmem, size = 0x12000, scoped, tag = 'internal scratch']
  %s0 = inlined_call_operand.vmem [shape: f32[64,16], index: 0, kind: input, shape index: {}]
  %s1 = inlined_call_operand.hbm [shape: f32[2,1,16], index: 1, kind: output, shape index: {0}]
  %s2 = inlined_call_operand.hbm [shape: f32[2,16,16], index: 2, kind: output, shape index: {1}]
  %s3 = inlined_call_operand.vmem [shape: bf16[64,16], index: 3, kind: output, shape index: {2}]
  %4 = xla_tuple %s1, %s2, %s3
  %s5 = sld [smem:[#allocation0]]
  $region53: #{tpu_custom_call.1} parent=0
    _
  %s7 = ssub.s32 1, %s5
  %s8 = scalar_select 0, %s7, %s5
  $region1: #{tpu_custom_call.1} parent=0
    #allocation2 [shape = 'u8[1024]{0}', space=vmem, size = 0x400, scoped, tag = 'output window, operand 0']
    #allocation3 [shape = 's32[2]{0}', space=sflag, size = 0x8, scoped, tag = 'scoped memory for tpu_custom_call.1']
    #allocation4 [shape = 'u8[16384]{0}', space=vmem, size = 0x4000, scoped, tag = 'output window, operand 1']
    #allocation5 [shape = 's32[2]{0}', space=sflag, size = 0x8, scoped, tag = 'scoped memory for tpu_custom_call.1']
    %9 = vsyncpa [#allocation3], 0
    %s10 = scalar_lea.sflag [#allocation3], 1
    %11 = vsyncpa %s10, 0
    %12 = vsyncpa [#allocation5], 0
    %s13 = scalar_lea.sflag [#allocation5], 1
    %14 = vsyncpa %s13, 0
    loop: start=0, step=1, limit=4
    $region2: #{tpu_custom_call.1} parent=1 // loop_pre_header
      _
    $region3: #{tpu_custom_call.1} parent=1 // loop_header
      %s16 = sphi 0, %s20
      %p17 = scmp.ge.s32.totalorder %s16, 4
      %s26 = sphi 0, %s28
      %s29 = sphi 0, %s26
      %s30 = sphi 0, %s29
      %s46 = sphi 0, %s30
      %s52 = sphi 0, %s54
      %s55 = sphi 0, %s52
      %s56 = sphi 0, %s55
      %s72 = sphi 0, %s56
      %s78 = sphi 0, %s80
      %s81 = sphi 0, %s78
      %s82 = sphi 0, %s81
      %s98 = sphi 0, %s82
      %s104 = sphi 0, %s106
      %s107 = sphi 0, %s104
      %s108 = sphi 0, %s107
      %s124 = sphi 0, %s108
    $region4: #{tpu_custom_call.1} parent=1 // loop_header_branch
      %19 = sbr.rel (%p17) target = $region8
    $region5: #{tpu_custom_call.1} parent=1 // loop_body
      %s21 = ssub.s32 %s16, 1
      %s22 = ssub.s32 %s16, 2
      %s23 = sadd.s32 %s16, 1
      %s24 = ssub.s32 %s16, %s23
      %p25 = scmp.eq.s32.totalorder %s24, 0
      %s27 = sadd.s32 %s26, 1
      %s28 = scalar_select %p25, %s26, %s27
      %p31 = pneg %p25
      %p32 = scmp.eq.s32.totalorder %s16, 1
      %p33 = por %p31, %p32
      %p34 = scmp.ne.s32.totalorder %s26, %s29
      %p35 = scmp.eq.s32.totalorder %s16, 0
      %p36 = por %p34, %p35
      %p37 = scmp.ne.s32.totalorder %s26, %s29
      %p38 = scmp.eq.s32.totalorder %s21, 1
      %p39 = por %p37, %p38
      %p40 = scmp.ne.s32.totalorder %s29, %s30
      %p41 = scmp.eq.s32.totalorder %s21, 0
      %p42 = por %p40, %p41
      %p43 = scmp.ne.s32.totalorder %s29, %s30
      %p44 = scmp.eq.s32.totalorder %s22, 1
      %p45 = por %p43, %p44
      %p47 = scmp.ne.s32.totalorder %s30, %s46
      %p48 = scmp.eq.s32.totalorder %s22, 0
      %p49 = por %p47, %p48
      %s50 = ssub.s32 %s16, %s23
      %p51 = scmp.eq.s32.totalorder %s50, 0
      %s53 = sadd.s32 %s52, 1
      %s54 = scalar_select %p51, %s52, %s53
      %p57 = pneg %p51
      %p58 = scmp.eq.s32.totalorder %s16, 1
      %p59 = por %p57, %p58
      %p60 = scmp.ne.s32.totalorder %s52, %s55
      %p61 = scmp.eq.s32.totalorder %s16, 0
      %p62 = por %p60, %p61
      %p63 = scmp.ne.s32.totalorder %s52, %s55
      %p64 = scmp.eq.s32.totalorder %s21, 1
      %p65 = por %p63, %p64
      %p66 = scmp.ne.s32.totalorder %s55, %s56
      %p67 = scmp.eq.s32.totalorder %s21, 0
      %p68 = por %p66, %p67
      %p69 = scmp.ne.s32.totalorder %s55, %s56
      %p70 = scmp.eq.s32.totalorder %s22, 1
      %p71 = por %p69, %p70
      %p73 = scmp.ne.s32.totalorder %s56, %s72
      %p74 = scmp.eq.s32.totalorder %s22, 0
      %p75 = por %p73, %p74
      %s76 = ssub.s32 %s16, %s23
      %p77 = scmp.eq.s32.totalorder %s76, 0
      %s79 = sadd.s32 %s78, 1
      %s80 = scalar_select %p77, %s78, %s79
      %p83 = pneg %p77
      %p84 = scmp.eq.s32.totalorder %s16, 1
      %p85 = por %p83, %p84
      %p86 = scmp.ne.s32.totalorder %s78, %s81
      %p87 = scmp.eq.s32.totalorder %s16, 0
      %p88 = por %p86, %p87
      %p89 = scmp.ne.s32.totalorder %s78, %s81
      %p90 = scmp.eq.s32.totalorder %s21, 1
      %p91 = por %p89, %p90
      %p92 = scmp.ne.s32.totalorder %s81, %s82
      %p93 = scmp.eq.s32.totalorder %s21, 0
      %p94 = por %p92, %p93
      %p95 = scmp.ne.s32.totalorder %s81, %s82
      %p96 = scmp.eq.s32.totalorder %s22, 1
      %p97 = por %p95, %p96
      %p99 = scmp.ne.s32.totalorder %s82, %s98
      %p100 = scmp.eq.s32.totalorder %s22, 0
      %p101 = por %p99, %p100
      %s102 = ssub.s32 %s16, %s23
      %p103 = scmp.eq.s32.totalorder %s102, 0
      %s105 = sadd.s32 %s104, 1
      %s106 = scalar_select %p103, %s104, %s105
      %p109 = pneg %p103
      %p110 = scmp.eq.s32.totalorder %s16, 1
      %p111 = por %p109, %p110
      %p112 = scmp.ne.s32.totalorder %s104, %s107
      %p113 = scmp.eq.s32.totalorder %s16, 0
      %p114 = por %p112, %p113
      %p115 = scmp.ne.s32.totalorder %s104, %s107
      %p116 = scmp.eq.s32.totalorder %s21, 1
      %p117 = por %p115, %p116
      %p118 = scmp.ne.s32.totalorder %s107, %s108
      %p119 = scmp.eq.s32.totalorder %s21, 0
      %p120 = por %p118, %p119
      %p121 = scmp.ne.s32.totalorder %s107, %s108
      %p122 = scmp.eq.s32.totalorder %s22, 1
      %p123 = por %p121, %p122
      %p125 = scmp.ne.s32.totalorder %s108, %s124
      %p126 = scmp.eq.s32.totalorder %s22, 0
      %p127 = por %p125, %p126
      %p128 = scmp.le.s32.totalorder 1, %s16
      %p129 = scmp.lt.s32.totalorder %s16, 3
      %p130 = pnand %p128, %p129
      %p131 = pneg %p130
      // Predicated region
      $region9: #{tpu_custom_call.1} parent=5 // pred_check
        _
      $region10: #{tpu_custom_call.1} parent=5 // pred_check_branch
        %133 = sbr.rel (%p130) target = $region12
      $region11: #{tpu_custom_call.1} parent=5 // pred_region
        %s134 = ssub.s32 %s16, 1
      $region12: #{tpu_custom_call.1} parent=5 // pred_fallthru
        _
      %p135 = scmp.lt.s32.totalorder %s16, 2
      // Predicated region
      $region13: #{tpu_custom_call.1} parent=5 // pred_check
        %p136 = pneg %p135
      $region14: #{tpu_custom_call.1} parent=5 // pred_check_branch
        %138 = sbr.rel (%p136) target = $region16
      $region15: #{tpu_custom_call.1} parent=5 // pred_region
        // Predicated region
        $region17: #{tpu_custom_call.1} parent=15 // pred_check
          %p139 = pneg %p36
        $region18: #{tpu_custom_call.1} parent=15 // pred_check_branch
          %141 = sbr.rel (%p139) target = $region20
        $region19: #{tpu_custom_call.1} parent=15 // pred_region
          %s142 = smul.u32 4, %s16
          %p143 = scmp.lt.s32.totalorder %s142, 7
          %s144 = scalar_select %p143, %s142, 7
          %s145 = smul.addr %s144, 8
          %s146 = scalar_lea.vmem %s0, %s145
          %s147 = smul.u32 4, %s16
        $region20: #{tpu_custom_call.1} parent=15 // pred_fallthru
          _
      $region16: #{tpu_custom_call.1} parent=5 // pred_fallthru
        _
      %p148 = scmp.le.s32.totalorder 1, %s16
      %p149 = scmp.lt.s32.totalorder %s16, 3
      %p150 = pnand %p148, %p149
      %p151 = pneg %p150
      // Predicated region
      $region21: #{tpu_custom_call.1} parent=5 // pred_check
        _
      $region22: #{tpu_custom_call.1} parent=5 // pred_check_branch
        %153 = sbr.rel (%p150) target = $region24
      $region23: #{tpu_custom_call.1} parent=5 // pred_region
        %s154 = ssub.s32 %s16, 1
        %s155 = smul.u32 4, %s21
        %p156 = scmp.lt.s32.totalorder %s155, 7
        %s157 = scalar_select %p156, %s155, 7
        %s158 = smul.addr %s157, 8
        %s159 = scalar_lea.vmem %s0, %s158
        %p160 = pneg %p42
        %p161 = pneg %p39
        %p162 = pneg %p68
        %p163 = pneg %p65
        %s164 = sand.u32 %s55, 1
        %s165 = scalar_lea.sflag [#allocation3], %s164
        %s166 = sand.u32 %s55, 1
        %s167 = scalar_lea.vmem [#allocation2], %s166
        %p168 = pneg %p94
        %p169 = pneg %p91
        %s170 = sand.u32 %s81, 1
        %s171 = scalar_lea.sflag [#allocation5], %s170
        %s172 = sand.u32 %s81, 1
        %s173 = smul.addr %s172, 16
        %s174 = scalar_lea.vmem [#allocation4], %s173
        %p175 = pneg %p120
        %p176 = pneg %p117
        %s177 = smul.u32 4, %s21
        %p178 = scmp.lt.s32.totalorder %s177, 7
        %s179 = scalar_select %p178, %s177, 7
        %s180 = smul.addr %s179, 4
        %s181 = scalar_lea.vmem %s3, %s180
        %s182 = smul.u32 4, %s21
        %p183 = scmp.lt.s32.totalorder %s182, 7
        %s184 = scalar_select %p183, %s182, 7
        %s185 = smul.addr %s184, 8
        %s186 = scalar_lea.vmem %s0, %s185
        %s187 = smul.u32 4, %s21
        %s188 = smul.u32 4, %s21
        %p189 = scmp.lt.s32.totalorder %s188, 7
        %s190 = scalar_select %p189, %s188, 7
        %s191 = smul.addr %s190, 4
        %s192 = scalar_lea.vmem %s3, %s191
        %s193 = smul.u32 4, %s21
        %v194 = vld [vmem:[%s186] sm:$0xff]
        %v195 = vld [vmem:[%s186 + $0x8] sm:$0xff]
        %v196 = vld [vmem:[%s186 + $0x10] sm:$0xff]
        %v197 = vld [vmem:[%s186 + $0x18] sm:$0xff]
        %vm198 = vcmask 130048
        %v199 = vsel %vm198, %v194, 0.0
        %v200 = vsel %vm198, %v195, 0.0
        %v201 = vadd.f32 %v199, %v200
        %v202 = vsel %vm198, %v196, 0.0
        %v203 = vadd.f32 %v201, %v202
        %v204 = vsel %vm198, %v197, 0.0
        %v205 = vadd.f32 %v203, %v204
        %v206 = vrot.slane %v205, 4
        %v207 = vadd.f32 %v205, %v206
        %v208 = vrot.slane %v207, 2
        %v209 = vadd.f32 %v207, %v208
        %v210 = vrot.slane %v209, 1
        %v211 = vadd.f32 %v209, %v210
        %vm212 = vcmask 122880
        %213 = vst.msk [vmem:[%s167] sm:$0x1] %vm212, %v211
        %214 = vxpose.xlu0.b32.start [1/16] %v194, 128
        %215 = vxpose.xlu0.b32.cont [2/16] %v195, 128
        %216 = vxpose.xlu0.b32.cont [3/16] %v196, 128
        %217 = vxpose.xlu0.b32.cont [4/16] %v197, 128
        %218 = vxpose.xlu0.b32.cont [5/16] 0.0, 128
        %219 = vxpose.xlu0.b32.cont [6/16] 0.0, 128
        %220 = vxpose.xlu0.b32.cont [7/16] 0.0, 128
        %221 = vxpose.xlu0.b32.cont [8/16] 0.0, 128
        %222 = vxpose.xlu0.b32.cont [9/16] 0.0, 128
        %223 = vxpose.xlu0.b32.cont [10/16] 0.0, 128
        %224 = vxpose.xlu0.b32.cont [11/16] 0.0, 128
        %225 = vxpose.xlu0.b32.cont [12/16] 0.0, 128
        %226 = vxpose.xlu0.b32.cont [13/16] 0.0, 128
        %227 = vxpose.xlu0.b32.cont [14/16] 0.0, 128
        %228 = vxpose.xlu0.b32.cont [15/16] 0.0, 128
        %229 = vxpose.xlu0.b32.end [16/16] 0.0, 128
        %v230 = vpop.trf.xlu0
        %v231 = vpop.trf.xlu0
        %v232 = vpop.trf.xlu0
        %v233 = vpop.trf.xlu0
        %v234 = vpop.trf.xlu0
        %v235 = vpop.trf.xlu0
        %v236 = vpop.trf.xlu0
        %v237 = vpop.trf.xlu0
        %v238 = vpop.trf.xlu0
        %v239 = vpop.trf.xlu0
        %v240 = vpop.trf.xlu0
        %v241 = vpop.trf.xlu0
        %v242 = vpop.trf.xlu0
        %v243 = vpop.trf.xlu0
        %v244 = vpop.trf.xlu0
        %v245 = vpop.trf.xlu0
        %vm246 = vcmask 261120
        %v248 = vsel %vm246, %v230, 0
        %v251 = vsel %vm246, %v231, 0
        %253 = vmatprep.subr.mxu0 0.0
        %254 = vmatpush1.msra.mxu0 0.0
        %255 = vmatprep.subr.mxu0 0.0
        %256 = vmatpush1.msra.mxu0 0.0
        %257 = vmatprep.subr.mxu0 0.0
        %258 = vmatpush1.msra.mxu0 0.0
        %259 = vmatprep.subr.mxu0 0.0
        %260 = vmatpush1.msra.mxu0 0.0
        %261 = vmatprep.subr.mxu0 0.0
        %262 = vmatpush1.msra.mxu0 0.0
        %263 = vmatprep.subr.mxu0 0.0
        %264 = vmatpush1.msra.mxu0 0.0
        %265 = vmatprep.subr.mxu0 0.0
        %266 = vmatpush1.msra.mxu0 0.0
        %267 = vmatprep.subr.mxu0 0.0
        %268 = vmatpush1.msra.mxu0 0.0
        %269 = vmatprep.subr.mxu0 0.0
        %270 = vmatpush1.msra.mxu0 0.0
        %271 = vmatprep.subr.mxu0 0.0
        %272 = vmatpush1.msra.mxu0 0.0
        %273 = vmatprep.subr.mxu0 0.0
        %274 = vmatpush1.msra.mxu0 0.0
        %275 = vmatprep.subr.mxu0 0.0
        %276 = vmatpush1.msra.mxu0 0.0
        %277 = vmatprep.subr.mxu0 0.0
        %278 = vmatpush1.msra.mxu0 %v197
        %279 = vmatprep.subr.mxu0 0.0
        %280 = vmatpush1.msra.mxu0 %v196
        %281 = vmatprep.subr.mxu0 0.0
        %282 = vmatpush1.msra.mxu0 %v195
        %283 = vmatprep.subr.mxu0 0.0
        %284 = vmatpush1.msra.mxu0 %v194
        %285 = vmatprep.subr.mxu0 0.0
        %286 = vmatpush2.msra.mxu0 0.0
        %287 = vmatprep.subr.mxu0 0.0
        %288 = vmatpush2.msra.mxu0 0.0
        %289 = vmatprep.subr.mxu0 0.0
        %290 = vmatpush2.msra.mxu0 0.0
        %291 = vmatprep.subr.mxu0 0.0
        %292 = vmatpush2.msra.mxu0 0.0
        %293 = vmatprep.subr.mxu0 0.0
        %294 = vmatpush2.msra.mxu0 0.0
        %295 = vmatprep.subr.mxu0 0.0
        %296 = vmatpush2.msra.mxu0 0.0
        %297 = vmatprep.subr.mxu0 0.0
        %298 = vmatpush2.msra.mxu0 0.0
        %299 = vmatprep.subr.mxu0 0.0
        %300 = vmatpush2.msra.mxu0 0.0
        %301 = vmatprep.subr.mxu0 0.0
        %302 = vmatpush2.msra.mxu0 0.0
        %303 = vmatprep.subr.mxu0 0.0
        %304 = vmatpush2.msra.mxu0 0.0
        %305 = vmatprep.subr.mxu0 0.0
        %306 = vmatpush2.msra.mxu0 0.0
        %307 = vmatprep.subr.mxu0 0.0
        %308 = vmatpush2.msra.mxu0 0.0
        %309 = vmatprep.subr.mxu0 0.0
        %310 = vmatpush2.msra.mxu0 0.0
        %311 = vmatprep.subr.mxu0 0.0
        %312 = vmatpush2.msra.mxu0 0.0
        %313 = vmatprep.subr.mxu0 0.0
        %314 = vmatpush2.msra.mxu0 0.0
        %315 = vmatprep.subr.mxu0 0.0
        %316 = vmatpush2.msra.mxu0 0.0
        %317 = vmatprep.mubr.f32.mxu0 0.0
        %318 = vmatmul.mubr.f32.gmra.mxu0 %v248
        %v319 = vpop.f32.mrf.mxu0
        %v320 = vadd.f32 0.0, %v319
        %v321 = vpop.f32.mrf.mxu0
        %322 = vmatprep.mubr.f32.mxu0 0.0
        %323 = vmatmul.mubr.f32.gmra.mxu0 %v251
        %v324 = vpop.f32.mrf.mxu0
        %v325 = vadd.f32 0.0, %v324
        %v326 = vpop.f32.mrf.mxu0
        %327 = vdwg.mxu0
        %328 = vst.msk [vmem:[%s174] sm:$0xff] %vm198, %v320
        %329 = vst.msk [vmem:[%s174 + $0x8] sm:$0xff] %vm198, %v325
        %v330 = vpack.c.bf16 %v195, %v194
        %v331 = vpack.c.bf16 %v197, %v196
        %v334 = vunpack.c.l.b16 %v330
        %v335 = vunpack.c.h.b16 %v330
        %v336 = vunpack.c.l.b16 %v331
        %v337 = vunpack.c.h.b16 %v331
        %v338 = vpack.c.b16 %v334, %v334
        %v339 = vpack.c.b16 %v335, %v335
        %v340 = vpack.c.b16 %v336, %v336
        %v341 = vpack.c.b16 %v337, %v337
        %vm346 = vcmask 125952
        %347 = vst.msk [vmem:[%s192] sm:$0xf] %vm346, %v338
        %348 = vst.msk [vmem:[%s192 + $0x4] sm:$0xf] %vm346, %v339
        %349 = vst.msk [vmem:[%s192 + $0x8] sm:$0xf] %vm346, %v340
        %350 = vst.msk [vmem:[%s192 + $0xc] sm:$0xf] %vm346, %v341
        %s351 = sand.u32 %s55, 1
        %s352 = scalar_lea.sflag [#allocation3], %s351
        %s353 = sand.u32 %s55, 1
        %s354 = scalar_lea.vmem [#allocation2], %s353
        %s355 = sand.u32 %s81, 1
        %s356 = scalar_lea.sflag [#allocation5], %s355
        %s357 = sand.u32 %s81, 1
        %s358 = smul.addr %s357, 16
        %s359 = scalar_lea.vmem [#allocation4], %s358
        %s360 = smul.u32 4, %s21
        %p361 = scmp.lt.s32.totalorder %s360, 7
        %s362 = scalar_select %p361, %s360, 7
        %s363 = smul.addr %s362, 4
        %s364 = scalar_lea.vmem %s3, %s363
        // Predicated region
        $region25: #{tpu_custom_call.1} parent=23 // pred_check
          %p365 = pneg %p65
        $region26: #{tpu_custom_call.1} parent=23 // pred_check_branch
          %367 = sbr.rel (%p365) target = $region28
        $region27: #{tpu_custom_call.1} parent=23 // pred_region
          %s369 = ssub.s32 16, 16
          %370 = vsyncadd %s352, %s369
          %s371 = smul.addr %s21, 16
          %s372 = scalar_lea.hbm %s1, %s371
          %s374 = sshll.u32 %s354, 4
          %s375 = int_to_ptr.vmem [resolvable:$true] %s374
          %377 = dma.vmem_to_hbm [thread:$0]  %s375, 16, %s372, %s352
        $region28: #{tpu_custom_call.1} parent=23 // pred_fallthru
          _
        // Predicated region
        $region29: #{tpu_custom_call.1} parent=23 // pred_check
          %p378 = pneg %p91
        $region30: #{tpu_custom_call.1} parent=23 // pred_check_branch
          %380 = sbr.rel (%p378) target = $region32
        $region31: #{tpu_custom_call.1} parent=23 // pred_region
          %s382 = ssub.s32 256, 256
          %383 = vsyncadd %s356, %s382
          %s384 = smul.addr %s21, 2
          %s385 = smul.addr %s384, 128
          %s386 = scalar_lea.hbm %s2, %s385
          %s387 = sshll.u32 %s359, 4
          %s388 = int_to_ptr.vmem [resolvable:$true] %s387
          %393 = dma.vmem_to_hbm [thread:$0]  %s388, 256, %s386, %s356, 128, 128, 8
        $region32: #{tpu_custom_call.1} parent=23 // pred_fallthru
          _
        // Predicated region
        $region33: #{tpu_custom_call.1} parent=23 // pred_check
          %p394 = pneg %p117
        $region34: #{tpu_custom_call.1} parent=23 // pred_check_branch
          %396 = sbr.rel (%p394) target = $region36
        $region35: #{tpu_custom_call.1} parent=23 // pred_region
          %s397 = smul.u32 4, %s21
        $region36: #{tpu_custom_call.1} parent=23 // pred_fallthru
          _
      $region24: #{tpu_custom_call.1} parent=5 // pred_fallthru
        _
      %p398 = scmp.le.s32.totalorder 2, %s16
      // Predicated region
      $region37: #{tpu_custom_call.1} parent=5 // pred_check
        %p399 = pneg %p398
      $region38: #{tpu_custom_call.1} parent=5 // pred_check_branch
        %401 = sbr.rel (%p399) target = $region40
      $region39: #{tpu_custom_call.1} parent=5 // pred_region
        %s402 = ssub.s32 %s16, 2
        // Predicated region
        $region41: #{tpu_custom_call.1} parent=39 // pred_check
          %p403 = pneg %p71
        $region42: #{tpu_custom_call.1} parent=39 // pred_check_branch
          %405 = sbr.rel (%p403) target = $region44
        $region43: #{tpu_custom_call.1} parent=39 // pred_region
          %s406 = sand.u32 %s56, 1
          %s407 = scalar_lea.sflag [#allocation3], %s406
          %s408 = sand.u32 %s56, 1
          %s409 = scalar_lea.vmem [#allocation2], %s408
          %410 = dma.done %s407, 16
        $region44: #{tpu_custom_call.1} parent=39 // pred_fallthru
          _
        // Predicated region
        $region45: #{tpu_custom_call.1} parent=39 // pred_check
          %p411 = pneg %p97
        $region46: #{tpu_custom_call.1} parent=39 // pred_check_branch
          %413 = sbr.rel (%p411) target = $region48
        $region47: #{tpu_custom_call.1} parent=39 // pred_region
          %s414 = sand.u32 %s82, 1
          %s415 = scalar_lea.sflag [#allocation5], %s414
          %s416 = sand.u32 %s82, 1
          %s417 = smul.addr %s416, 16
          %s418 = scalar_lea.vmem [#allocation4], %s417
          %419 = dma.done %s415, 256
        $region48: #{tpu_custom_call.1} parent=39 // pred_fallthru
          _
        // Predicated region
        $region49: #{tpu_custom_call.1} parent=39 // pred_check
          %p420 = pneg %p123
        $region50: #{tpu_custom_call.1} parent=39 // pred_check_branch
          %422 = sbr.rel (%p420) target = $region52
        $region51: #{tpu_custom_call.1} parent=39 // pred_region
          %s423 = smul.u32 4, %s22
          %p424 = scmp.lt.s32.totalorder %s423, 7
          %s425 = scalar_select %p424, %s423, 7
          %s426 = smul.addr %s425, 4
          %s427 = scalar_lea.vmem %s3, %s426
        $region52: #{tpu_custom_call.1} parent=39 // pred_fallthru
          _
      $region40: #{tpu_custom_call.1} parent=5 // pred_fallthru
        _
    $region6: #{tpu_custom_call.1} parent=1 // loop_footer
      %s20 = sadd.s32 1, %s16
    $region7: #{tpu_custom_call.1} parent=1 // loop_footer_branch
      %15 = sbr.rel target = $region3
    $region8: #{tpu_custom_call.1} parent=1 // loop_exit
      _
    %428 = vsyncpa [#allocation3], 1
    %s429 = scalar_lea.sflag [#allocation3], 1
    %430 = vsyncpa %s429, 1
    %431 = vsyncpa [#allocation5], 1
    %s432 = scalar_lea.sflag [#allocation5], 1
    %433 = vsyncpa %s432, 1

</llo_original>
